<compile_context>
chip_gen: v5e
topology: v5e:2x2
jax: 0.10.0
libtpu: 0.0.40
codegen_flags: <defaults>
</compile_context>

<pallas_src>
import functools

import jax
import jax.numpy as jnp
import numpy as np
from jax.experimental import pallas as pl
from jax.experimental.pallas import tpu as pltpu


def _cdiv(a: int, b: int) -> int:
    return -(-a // b)


def _vit_token_kernel(tok_ref, w_ref, rc_ref, o_ref):
    # tok_ref: (1, TM, K) bf16  token rows (row 0 of the array is the all-zero
    #                           cls placeholder, rows 1..N are the patches)
    # w_ref:   (K, D)     bf16  conv weight as a matmul matrix (grid-resident)
    # rc_ref:  (TM, D)    f32   per-token additive constant:
    #                           row 0 = cls_token + pos_emb[0],
    #                           rows 1..N = pos_emb[1:] + conv bias
    # o_ref:   (1, TM, D)       output tokens
    emb = jnp.dot(tok_ref[0], w_ref[...],
                  preferred_element_type=jnp.float32)          # (TM, D) f32
    o_ref[0] = (emb + rc_ref[...]).astype(o_ref.dtype)


@functools.partial(jax.jit, static_argnames=("num_patch_row", "tm"))
def vit_input_layer(x, conv_w, conv_b, cls_token, pos_emb,
                    num_patch_row: int, tm: int = 256):
    """ViT input layer.  x: (B, C, H, W) NCHW (as in PyTorch).
    Returns (B, N+1, D) = [cls ; patch tokens] + pos_emb."""
    assert tm % 8 == 0, "token tile must be a multiple of 8"
    B, C, H, W = x.shape
    nP = num_patch_row
    P = H // nP
    N = nP * nP
    D = conv_w.shape[0]
    K = C * P * P
    T = N + 1                                     # tokens incl. cls
    out_dtype = x.dtype
    out_isize = jnp.dtype(out_dtype).itemsize

    TM = T if T <= tm else tm                     # full-dim block for small T
    n_tiles = _cdiv(T, TM)                        # partial last block is OK

    # --- wrapper-side prep (kept to the one unavoidable relayout pass) ------
    # Cast to bf16 BEFORE the patch relayout (halves that pass's HBM bytes).
    xb = x.astype(jnp.bfloat16)
    patches = xb.reshape(B, C, nP, P, nP, P)
    patches = patches.transpose(0, 2, 4, 1, 3, 5).reshape(B, N, K)   # (B,N,K)
    # Prepend one all-zero token row per image: its matmul result is 0, so the
    # row-constant below turns it into the cls token.  This replaces the old
    # post-kernel concatenate over the (2x larger) f32 output.
    tokens = jnp.pad(patches, ((0, 0), (1, 0), (0, 0)))              # (B,T,K)

    # Conv weight (D, C, P, P) -> (K, D), k ordered as (c, i, j); bf16 for MXU.
    w_mat = conv_w.reshape(D, K).T.astype(jnp.bfloat16)              # (K, D)

    # Per-token additive constant (f32, tiny: (N+1, D)).
    pos = pos_emb.reshape(T, D).astype(jnp.float32)
    row_const = jnp.concatenate(
        [cls_token.reshape(1, D).astype(jnp.float32) + pos[:1],
         pos[1:] + conv_b.reshape(1, D).astype(jnp.float32)], axis=0)  # (T,D)

    # --- grid ordering -------------------------------------------------------
    if n_tiles == 1:
        # Single token tile: row_const is one block regardless of order, so put
        # the (large) batch axis outermost for the v7x megacore split.
        grid = (B, n_tiles)
        tok_map = lambda b, m: (b, m, 0)
        w_map = lambda b, m: (0, 0)
        rc_map = lambda b, m: (m, 0)
        out_map = lambda b, m: (b, m, 0)
    else:
        # Token tiles outermost, batch innermost: row_const block index is
        # constant across the inner batch loop -> DMA'd once per tile instead
        # of once per (batch, tile).
        grid = (n_tiles, B)
        tok_map = lambda m, b: (b, m, 0)
        w_map = lambda m, b: (0, 0)
        rc_map = lambda m, b: (m, 0)
        out_map = lambda m, b: (b, m, 0)

    # VMEM budget from actual tile sizes (everything double-buffered by
    # default, including the grid-constant weight / row_const blocks).
    # TODO(synk): on v7x with very large D, single-buffer the resident weight
    #   (pipeline_mode=pl.Buffered(1)) to halve its VMEM footprint.
    tile_bytes = (2 * TM * K * 2            # token tile, bf16, x2 buffers
                  + 2 * K * D * 2           # weight, bf16, x2 buffers
                  + 2 * TM * D * 4          # row_const, f32, x2 buffers
                  + 2 * TM * D * out_isize)  # output tile, x2 buffers
    vmem_limit = int(min(64 * 2 ** 20, max(2 * tile_bytes, 16 * 2 ** 20)))

    cost = pl.CostEstimate(
        flops=2 * B * T * K * D,
        transcendentals=0,
        bytes_accessed=(B * T * K * 2              # tokens read once
                        + K * D * 2                # weight read once
                        + n_tiles * TM * D * 4     # row_const once per tile
                        + B * T * D * out_isize),  # output written once
    )

    out = pl.pallas_call(
        _vit_token_kernel,
        out_shape=jax.ShapeDtypeStruct((B, T, D), out_dtype),
        grid_spec=pltpu.PrefetchScalarGridSpec(
            num_scalar_prefetch=0,
            grid=grid,
            in_specs=[
                pl.BlockSpec((1, TM, K), tok_map),
                pl.BlockSpec((K, D), w_map),       # constant index -> resident
                pl.BlockSpec((TM, D), rc_map),
            ],
            out_specs=pl.BlockSpec((1, TM, D), out_map),
        ),
        compiler_params=pltpu.CompilerParams(
            dimension_semantics=("parallel", "parallel"),
            vmem_limit_bytes=vmem_limit),
        cost_estimate=cost,
    )(tokens, w_mat, row_const)

    return out                                    # (B, N+1, D), no post-passes


def _reference_f32(x, conv_w, conv_b, cls_token, pos_emb, num_patch_row):
    """Pure-JAX f32 reference mimicking the PyTorch forward exactly."""
    B = x.shape[0]
    P = x.shape[2] // num_patch_row
    D = conv_w.shape[0]
    y = jax.lax.conv_general_dilated(
        x, conv_w, window_strides=(P, P), padding="VALID",
        dimension_numbers=("NCHW", "OIHW", "NCHW"),
        precision=jax.lax.Precision.HIGHEST)               # (B, D, nP, nP)
    y = y + conv_b.reshape(1, D, 1, 1)
    y = y.reshape(B, D, -1).transpose(0, 2, 1)             # (B, N, D)
    cls = jnp.broadcast_to(cls_token, (B, 1, D))
    y = jnp.concatenate([cls, y], axis=1)
    return y + pos_emb


def _reference_bf16(x, conv_w, conv_b, cls_token, pos_emb, num_patch_row):
    """Reference with bf16-rounded MXU operands and f32 accumulation (matches
    the kernel's numerics up to summation order)."""
    B, C, H, W = x.shape
    nP = num_patch_row
    P = H // nP
    N = nP * nP
    D = conv_w.shape[0]
    K = C * P * P
    patches = x.astype(jnp.bfloat16).astype(jnp.float32)
    patches = patches.reshape(B, C, nP, P, nP, P)
    patches = patches.transpose(0, 2, 4, 1, 3, 5).reshape(B, N, K)
    w = conv_w.reshape(D, K).T.astype(jnp.bfloat16).astype(jnp.float32)
    emb = jnp.matmul(patches, w, precision=jax.lax.Precision.HIGHEST)
    emb = emb + conv_b.reshape(1, 1, D)
    cls = jnp.broadcast_to(cls_token.reshape(1, 1, D), (B, 1, D))
    y = jnp.concatenate([cls, emb], axis=1)
    return (y + pos_emb.reshape(1, N + 1, D)).astype(x.dtype)


if __name__ == "__main__":
    def _run_case(B, C, image_size, num_patch_row, emb_dim, tm):
        P = image_size // num_patch_row
        N = num_patch_row ** 2
        key = jax.random.PRNGKey(0)
        kx, kw, kb, kc, kp = jax.random.split(key, 5)
        x = jax.random.normal(kx, (B, C, image_size, image_size), jnp.float32)
        conv_w = jax.random.normal(kw, (emb_dim, C, P, P), jnp.float32) * 0.02
        conv_b = jax.random.normal(kb, (emb_dim,), jnp.float32) * 0.02
        cls_token = jax.random.normal(kc, (1, 1, emb_dim), jnp.float32)
        pos_emb = jax.random.normal(kp, (1, N + 1, emb_dim), jnp.float32)

        out = vit_input_layer(x, conv_w, conv_b, cls_token, pos_emb,
                              num_patch_row, tm=tm)
        out = jax.block_until_ready(out)
        assert out.shape == (B, N + 1, emb_dim), out.shape

        # Tight check vs a reference with identical bf16-operand / f32-acc
        # numerics.
        ref_bf16 = jax.block_until_ready(
            _reference_bf16(x, conv_w, conv_b, cls_token, pos_emb,
                            num_patch_row))
        np.testing.assert_allclose(np.asarray(out), np.asarray(ref_bf16),
                                   rtol=2e-4, atol=2e-4)
        # Loose check vs the exact f32 PyTorch-equivalent forward (difference
        # is only the bf16 rounding of the MXU operands).
        ref_f32 = jax.block_until_ready(
            _reference_f32(x, conv_w, conv_b, cls_token, pos_emb,
                           num_patch_row))
        np.testing.assert_allclose(np.asarray(out), np.asarray(ref_f32),
                                   rtol=2e-2, atol=2e-2)

    # Case 1: small module-style config -> single full-extent token tile,
    # batch-outer grid (n_tiles == 1 path).
    _run_case(B=2, C=3, image_size=16, num_patch_row=2, emb_dim=32, tm=256)
    # Case 2: multi-tile path with a partial final token block
    # (T = 17 tokens, TM = 16 -> 2 tiles), exercising the reordered
    # (token_tiles, batch) grid with the row-constant DMA'd once per tile.
    _run_case(B=2, C=3, image_size=32, num_patch_row=4, emb_dim=32, tm=16)

    print("KERNEL_OK")
</pallas_src>

<mosaic_0001>
module attributes {stable_mosaic.version = 11 : i64} {
  func.func @_vit_token_kernel(%arg0: i32, %arg1: i32, %arg2: memref<1x5x192xbf16, #tpu.memory_space<vmem>>, %arg3: memref<192x32xbf16, #tpu.memory_space<vmem>>, %arg4: memref<5x32xf32, #tpu.memory_space<vmem>>, %arg5: memref<1x5x32xf32, #tpu.memory_space<vmem>>) attributes {dimension_semantics = [#tpu.dimension_semantics<parallel>, #tpu.dimension_semantics<parallel>], iteration_bounds = array<i64: 2, 1>, scalar_prefetch = 0 : i64, scratch_operands = 0 : i64, tpu.core_type = #tpu.core_type<tc>, window_params = [{transform_indices = @transform_0, window_bounds = array<i64: 1, 5, 192>}, {pipeline_mode = #tpu.pipeline_mode<synchronous>, transform_indices = @transform_1, window_bounds = array<i64: 192, 32>}, {transform_indices = @transform_2, window_bounds = array<i64: 5, 32>}, {transform_indices = @transform_3, window_bounds = array<i64: 1, 5, 32>}]} {
    %c0 = arith.constant 0 : index
    %c0_0 = arith.constant 0 : index
    %c0_1 = arith.constant 0 : index
    %0 = vector.load %arg2[%c0, %c0_0, %c0_1] : memref<1x5x192xbf16, #tpu.memory_space<vmem>>, vector<1x5x192xbf16>
    %1 = vector.shape_cast %0 : vector<1x5x192xbf16> to vector<5x192xbf16>
    %c0_2 = arith.constant 0 : index
    %c0_3 = arith.constant 0 : index
    %2 = vector.load %arg3[%c0_2, %c0_3] : memref<192x32xbf16, #tpu.memory_space<vmem>>, vector<192x32xbf16>
    %cst = arith.constant dense<0.000000e+00> : vector<5x32xf32>
    %3 = tpu.matmul %1, %2, %cst {dimension_numbers = #tpu.dot_dimension_numbers<[1], [0], [0], [1], [0, 0, 1, 1], [], []>} : vector<5x192xbf16>, vector<192x32xbf16>, vector<5x32xf32> -> vector<5x32xf32>
    %c0_4 = arith.constant 0 : index
    %c0_5 = arith.constant 0 : index
    %4 = vector.load %arg4[%c0_4, %c0_5] : memref<5x32xf32, #tpu.memory_space<vmem>>, vector<5x32xf32>
    %5 = arith.addf %3, %4 : vector<5x32xf32>
    %c0_6 = arith.constant 0 : index
    %c0_7 = arith.constant 0 : index
    %c0_8 = arith.constant 0 : index
    %6 = vector.load %arg5[%c0_6, %c0_7, %c0_8] : memref<1x5x32xf32, #tpu.memory_space<vmem>>, vector<1x5x32xf32>
    %7 = vector.shape_cast %6 : vector<1x5x32xf32> to vector<5x32xf32>
    %8 = vector.shape_cast %5 : vector<5x32xf32> to vector<1x5x32xf32>
    tpu.vector_store %arg5[%c0_6, %c0_7, %c0_8], %8 {strides = array<i32>} : memref<1x5x32xf32, #tpu.memory_space<vmem>>, vector<1x5x32xf32>,
    return
  }
  func.func @transform_0(%arg0: i32, %arg1: i32) -> (i32, i32, i32) {
    %c0_i32 = arith.constant 0 : i32
    %c0_i32_0 = arith.constant 0 : i32
    return %arg0, %arg1, %c0_i32 : i32, i32, i32
  }
  func.func @transform_1(%arg0: i32, %arg1: i32) -> (i32, i32) {
    %c0_i32 = arith.constant 0 : i32
    %c0_i32_0 = arith.constant 0 : i32
    %c0_i32_1 = arith.constant 0 : i32
    return %c0_i32, %c0_i32_0 : i32, i32
  }
  func.func @transform_2(%arg0: i32, %arg1: i32) -> (i32, i32) {
    %c0_i32 = arith.constant 0 : i32
    %c0_i32_0 = arith.constant 0 : i32
    return %arg1, %c0_i32 : i32, i32
  }
  func.func @transform_3(%arg0: i32, %arg1: i32) -> (i32, i32, i32) {
    %c0_i32 = arith.constant 0 : i32
    %c0_i32_0 = arith.constant 0 : i32
    return %arg0, %arg1, %c0_i32 : i32, i32, i32
  }
}

</mosaic_0001>

<llo_original>
// kernel: vit_input_layer.1
$region0: #{vit_input_layer.1}
  #allocation0 [shape = 'u32[]', space=smem, size = 0x4, offset = 0x4, fixed_abs, tag = 'smem constant byte address 0x4 - core index']
  #allocation1 [shape = 'u32[72,128]{1,0:T(1,128)}', space=vmem, size = 0x9000, scoped, tag = 'internal scratch']
  %s0 = inlined_call_operand.vmem [shape: bf16[2,5,192], index: 0, kind: input, shape index: {}]
  %s1 = inlined_call_operand.vmem [shape: bf16[192,32], index: 1, kind: input, shape index: {}]
  %s2 = inlined_call_operand.vmem [shape: f32[5,32], index: 2, kind: input, shape index: {}]
  %s3 = inlined_call_operand.vmem [shape: f32[2,5,32], index: 3, kind: output, shape index: {}]
  %s4 = sld [smem:[#allocation0]]
  $region45: #{vit_input_layer.1} parent=0
    _
  %s6 = ssub.s32 1, %s4
  %s7 = scalar_select 0, %s6, %s4
  loop: start=0, step=1, limit=4
  $region2: #{vit_input_layer.1} parent=0 // loop_pre_header
    _
  $region3: #{vit_input_layer.1} parent=0 // loop_header
    %s9 = sphi 0, %s13
    %p10 = scmp.ge.s32.totalorder %s9, 4
    %s16 = sphi 0, %s28
    %s17 = sphi 0, %s24
    %s18 = sphi 0, %s16
    %s19 = sphi 0, %s17
    %s20 = sphi 0, %s18
    %s21 = sphi 0, %s19
    %s33 = sphi 0, %s35
    %s36 = sphi 0, %s33
    %s37 = sphi 0, %s36
    %s53 = sphi 0, %s37
    %s57 = sphi 0, %s57
    %s59 = sphi 0, %s57
    %s60 = sphi 0, %s59
    %s74 = sphi 0, %s60
    %s80 = sphi 0, %s82
    %s83 = sphi 0, %s80
    %s84 = sphi 0, %s83
    %s100 = sphi 0, %s84
    %s108 = sphi 0, %s110
    %s111 = sphi 0, %s108
    %s112 = sphi 0, %s111
    %s128 = sphi 0, %s112
  $region4: #{vit_input_layer.1} parent=0 // loop_header_branch
    %12 = sbr.rel (%p10) target = $region8
  $region5: #{vit_input_layer.1} parent=0 // loop_body
    %s14 = ssub.s32 %s9, 1
    %s15 = ssub.s32 %s9, 2
    %s22 = sadd.s32 1, %s17
    %p23 = scmp.ge.s32.totalorder %s22, 1
    %s24 = scalar_select %p23, 0, %s22
    %s25 = sadd.s32 1, %s16
    %s26 = scalar_select %p23, %s25, %s16
    %p27 = scmp.ge.s32.totalorder %s26, 2
    %s28 = scalar_select %p27, 0, %s26
    %s29 = ssub.s32 %s16, %s28
    %s30 = ssub.s32 %s17, %s24
    %s31 = sor.u32 %s29, %s30
    %p32 = scmp.eq.s32.totalorder %s31, 0
    %s34 = sadd.s32 %s33, 1
    %s35 = scalar_select %p32, %s33, %s34
    %p38 = pneg %p32
    %p39 = scmp.eq.s32.totalorder %s9, 1
    %p40 = por %p38, %p39
    %p41 = scmp.ne.s32.totalorder %s33, %s36
    %p42 = scmp.eq.s32.totalorder %s9, 0
    %p43 = por %p41, %p42
    %p44 = scmp.ne.s32.totalorder %s33, %s36
    %p45 = scmp.eq.s32.totalorder %s14, 1
    %p46 = por %p44, %p45
    %p47 = scmp.ne.s32.totalorder %s36, %s37
    %p48 = scmp.eq.s32.totalorder %s14, 0
    %p49 = por %p47, %p48
    %p50 = scmp.ne.s32.totalorder %s36, %s37
    %p51 = scmp.eq.s32.totalorder %s15, 1
    %p52 = por %p50, %p51
    %p54 = scmp.ne.s32.totalorder %s37, %s53
    %p55 = scmp.eq.s32.totalorder %s15, 0
    %p56 = por %p54, %p55
    %s58 = sadd.s32 %s57, 1
    %p61 = scmp.eq.s32.totalorder %s9, 1
    %p62 = scmp.ne.s32.totalorder %s57, %s59
    %p63 = scmp.eq.s32.totalorder %s9, 0
    %p64 = por %p62, %p63
    %p65 = scmp.ne.s32.totalorder %s57, %s59
    %p66 = scmp.eq.s32.totalorder %s14, 1
    %p67 = por %p65, %p66
    %p68 = scmp.ne.s32.totalorder %s59, %s60
    %p69 = scmp.eq.s32.totalorder %s14, 0
    %p70 = por %p68, %p69
    %p71 = scmp.ne.s32.totalorder %s59, %s60
    %p72 = scmp.eq.s32.totalorder %s15, 1
    %p73 = por %p71, %p72
    %p75 = scmp.ne.s32.totalorder %s60, %s74
    %p76 = scmp.eq.s32.totalorder %s15, 0
    %p77 = por %p75, %p76
    %s78 = ssub.s32 %s17, %s24
    %p79 = scmp.eq.s32.totalorder %s78, 0
    %s81 = sadd.s32 %s80, 1
    %s82 = scalar_select %p79, %s80, %s81
    %p85 = pneg %p79
    %p86 = scmp.eq.s32.totalorder %s9, 1
    %p87 = por %p85, %p86
    %p88 = scmp.ne.s32.totalorder %s80, %s83
    %p89 = scmp.eq.s32.totalorder %s9, 0
    %p90 = por %p88, %p89
    %p91 = scmp.ne.s32.totalorder %s80, %s83
    %p92 = scmp.eq.s32.totalorder %s14, 1
    %p93 = por %p91, %p92
    %p94 = scmp.ne.s32.totalorder %s83, %s84
    %p95 = scmp.eq.s32.totalorder %s14, 0
    %p96 = por %p94, %p95
    %p97 = scmp.ne.s32.totalorder %s83, %s84
    %p98 = scmp.eq.s32.totalorder %s15, 1
    %p99 = por %p97, %p98
    %p101 = scmp.ne.s32.totalorder %s84, %s100
    %p102 = scmp.eq.s32.totalorder %s15, 0
    %p103 = por %p101, %p102
    %s104 = ssub.s32 %s16, %s28
    %s105 = ssub.s32 %s17, %s24
    %s106 = sor.u32 %s104, %s105
    %p107 = scmp.eq.s32.totalorder %s106, 0
    %s109 = sadd.s32 %s108, 1
    %s110 = scalar_select %p107, %s108, %s109
    %p113 = pneg %p107
    %p114 = scmp.eq.s32.totalorder %s9, 1
    %p115 = por %p113, %p114
    %p116 = scmp.ne.s32.totalorder %s108, %s111
    %p117 = scmp.eq.s32.totalorder %s9, 0
    %p118 = por %p116, %p117
    %p119 = scmp.ne.s32.totalorder %s108, %s111
    %p120 = scmp.eq.s32.totalorder %s14, 1
    %p121 = por %p119, %p120
    %p122 = scmp.ne.s32.totalorder %s111, %s112
    %p123 = scmp.eq.s32.totalorder %s14, 0
    %p124 = por %p122, %p123
    %p125 = scmp.ne.s32.totalorder %s111, %s112
    %p126 = scmp.eq.s32.totalorder %s15, 1
    %p127 = por %p125, %p126
    %p129 = scmp.ne.s32.totalorder %s112, %s128
    %p130 = scmp.eq.s32.totalorder %s15, 0
    %p131 = por %p129, %p130
    %p132 = scmp.le.s32.totalorder 1, %s9
    %p133 = scmp.lt.s32.totalorder %s9, 3
    %p134 = pnand %p132, %p133
    %p135 = pneg %p134
    // Predicated region
    $region9: #{vit_input_layer.1} parent=5 // pred_check
      _
    $region10: #{vit_input_layer.1} parent=5 // pred_check_branch
      %137 = sbr.rel (%p134) target = $region12
    $region11: #{vit_input_layer.1} parent=5 // pred_region
      %s138 = ssub.s32 %s9, 1
      // Predicated region
      $region13: #{vit_input_layer.1} parent=11 // pred_check
        %p139 = pneg %p70
      $region14: #{vit_input_layer.1} parent=11 // pred_check_branch
        %141 = sbr.rel (%p139) target = $region16
      $region15: #{vit_input_layer.1} parent=11 // pred_region
        _
      $region16: #{vit_input_layer.1} parent=11 // pred_fallthru
        _
      // Predicated region
      $region17: #{vit_input_layer.1} parent=11 // pred_check
        %p142 = pneg %p96
      $region18: #{vit_input_layer.1} parent=11 // pred_check_branch
        %144 = sbr.rel (%p142) target = $region20
      $region19: #{vit_input_layer.1} parent=11 // pred_region
        %p145 = scmp.lt.s32.totalorder %s19, 0
        %s146 = scalar_select %p145, %s19, 0
        %s147 = smul.addr %s146, 8
        %s148 = scalar_lea.vmem %s2, %s147
      $region20: #{vit_input_layer.1} parent=11 // pred_fallthru
        _
    $region12: #{vit_input_layer.1} parent=5 // pred_fallthru
      _
    %p149 = scmp.lt.s32.totalorder %s9, 2
    // Predicated region
    $region21: #{vit_input_layer.1} parent=5 // pred_check
      %p150 = pneg %p149
    $region22: #{vit_input_layer.1} parent=5 // pred_check_branch
      %152 = sbr.rel (%p150) target = $region24
    $region23: #{vit_input_layer.1} parent=5 // pred_region
      // Predicated region
      $region25: #{vit_input_layer.1} parent=23 // pred_check
        %p153 = pneg %p43
      $region26: #{vit_input_layer.1} parent=23 // pred_check_branch
        %155 = sbr.rel (%p153) target = $region28
      $region27: #{vit_input_layer.1} parent=23 // pred_region
        %p156 = scmp.lt.s32.totalorder %s16, 1
        %s157 = scalar_select %p156, %s16, 1
        %p158 = scmp.lt.s32.totalorder %s17, 0
        %s159 = scalar_select %p158, %s17, 0
        %s160 = smul.addr %s159, 2
        %s161 = smul.addr %s157, 2
        %s162 = sadd.s32 %s160, %s161
        %s163 = smul.addr %s162, 4
        %s164 = scalar_lea.vmem %s0, %s163
      $region28: #{vit_input_layer.1} parent=23 // pred_fallthru
        _
    $region24: #{vit_input_layer.1} parent=5 // pred_fallthru
      _
    %p165 = scmp.le.s32.totalorder 1, %s9
    %p166 = scmp.lt.s32.totalorder %s9, 3
    %p167 = pnand %p165, %p166
    %p168 = pneg %p167
    // Predicated region
    $region29: #{vit_input_layer.1} parent=5 // pred_check
      _
    $region30: #{vit_input_layer.1} parent=5 // pred_check_branch
      %170 = sbr.rel (%p167) target = $region32
    $region31: #{vit_input_layer.1} parent=5 // pred_region
      %s171 = ssub.s32 %s9, 1
      %p172 = scmp.lt.s32.totalorder %s18, 1
      %s173 = scalar_select %p172, %s18, 1
      %p174 = scmp.lt.s32.totalorder %s19, 0
      %s175 = scalar_select %p174, %s19, 0
      %s176 = smul.addr %s175, 2
      %s177 = smul.addr %s173, 2
      %s178 = sadd.s32 %s176, %s177
      %s179 = smul.addr %s178, 4
      %s180 = scalar_lea.vmem %s0, %s179
      %p181 = pneg %p49
      %p182 = pneg %p46
      %p183 = pneg %p70
      %p184 = pneg %p67
      %p185 = scmp.lt.s32.totalorder %s19, 0
      %s186 = scalar_select %p185, %s19, 0
      %s187 = smul.addr %s186, 8
      %s188 = scalar_lea.vmem %s2, %s187
      %p189 = pneg %p96
      %p190 = pneg %p93
      %p191 = pneg %p124
      %p192 = pneg %p121
      %p193 = scmp.lt.s32.totalorder %s18, 1
      %s194 = scalar_select %p193, %s18, 1
      %p195 = scmp.lt.s32.totalorder %s19, 0
      %s196 = scalar_select %p195, %s19, 0
      %s197 = sadd.s32 %s196, %s194
      %s198 = smul.addr %s197, 8
      %s199 = scalar_lea.vmem %s3, %s198
      %p200 = scmp.lt.s32.totalorder %s18, 1
      %s201 = scalar_select %p200, %s18, 1
      %p202 = scmp.lt.s32.totalorder %s19, 0
      %s203 = scalar_select %p202, %s19, 0
      %s204 = smul.addr %s203, 2
      %s205 = smul.addr %s201, 2
      %s206 = sadd.s32 %s204, %s205
      %s207 = smul.addr %s206, 4
      %s208 = scalar_lea.vmem %s0, %s207
      %p209 = scmp.lt.s32.totalorder %s19, 0
      %s210 = scalar_select %p209, %s19, 0
      %s211 = smul.addr %s210, 8
      %s212 = scalar_lea.vmem %s2, %s211
      %p213 = scmp.lt.s32.totalorder %s18, 1
      %s214 = scalar_select %p213, %s18, 1
      %p215 = scmp.lt.s32.totalorder %s19, 0
      %s216 = scalar_select %p215, %s19, 0
      %s217 = sadd.s32 %s216, %s214
      %s218 = smul.addr %s217, 8
      %s219 = scalar_lea.vmem %s3, %s218
      %v221 = vld [vmem:[%s208] sm:$0x77]
      %v222 = vld [vmem:[%s1] sm:$0xf]
      %v223 = vld [vmem:[%s1 + $0x4] sm:$0xf]
      %v224 = vld [vmem:[%s1 + $0x8] sm:$0xf]
      %v225 = vld [vmem:[%s1 + $0xc] sm:$0xf]
      %v226 = vld [vmem:[%s1 + $0x10] sm:$0xf]
      %v227 = vld [vmem:[%s1 + $0x14] sm:$0xf]
      %v228 = vld [vmem:[%s1 + $0x18] sm:$0xf]
      %v229 = vld [vmem:[%s1 + $0x1c] sm:$0xf]
      %v230 = vld [vmem:[%s1 + $0x20] sm:$0xf]
      %v231 = vld [vmem:[%s1 + $0x24] sm:$0xf]
      %v232 = vld [vmem:[%s1 + $0x28] sm:$0xf]
      %v233 = vld [vmem:[%s1 + $0x2c] sm:$0xf]
      %v234 = vld [vmem:[%s1 + $0x30] sm:$0xf]
      %v235 = vld [vmem:[%s1 + $0x34] sm:$0xf]
      %v236 = vld [vmem:[%s1 + $0x38] sm:$0xf]
      %v237 = vld [vmem:[%s1 + $0x3c] sm:$0xf]
      %v238 = vld [vmem:[%s1 + $0x40] sm:$0xf]
      %v239 = vld [vmem:[%s1 + $0x44] sm:$0xf]
      %v240 = vld [vmem:[%s1 + $0x48] sm:$0xf]
      %v241 = vld [vmem:[%s1 + $0x4c] sm:$0xf]
      %v242 = vld [vmem:[%s1 + $0x50] sm:$0xf]
      %v243 = vld [vmem:[%s1 + $0x54] sm:$0xf]
      %v244 = vld [vmem:[%s1 + $0x58] sm:$0xf]
      %v245 = vld [vmem:[%s1 + $0x5c] sm:$0xf]
      %v246 = vld [vmem:[%s212] sm:$0x1f]
      %v248 = vunpack.c.l.b16 %v221
      %v249 = vunpack.c.h.b16 %v221
      %v250 = vpack.c.b16 %v248, %v248
      %v251 = vpack.c.b16 %v249, %v249
      %v277 = vunpack.c.l.b16 %v222
      %v278 = vunpack.c.l.b16 %v223
      %v279 = vunpack.c.l.b16 %v224
      %v280 = vunpack.c.l.b16 %v225
      %v281 = vunpack.c.l.b16 %v226
      %v282 = vunpack.c.l.b16 %v227
      %v283 = vunpack.c.l.b16 %v228
      %v284 = vunpack.c.l.b16 %v229
      %v285 = vunpack.c.l.b16 %v230
      %v286 = vunpack.c.l.b16 %v231
      %v287 = vunpack.c.l.b16 %v232
      %v288 = vunpack.c.l.b16 %v233
      %v289 = vunpack.c.l.b16 %v234
      %v290 = vunpack.c.l.b16 %v235
      %v291 = vunpack.c.l.b16 %v236
      %v292 = vunpack.c.l.b16 %v237
      %v293 = vunpack.c.l.b16 %v238
      %v294 = vunpack.c.l.b16 %v239
      %v295 = vunpack.c.l.b16 %v240
      %v296 = vunpack.c.l.b16 %v241
      %v297 = vunpack.c.l.b16 %v242
      %v298 = vunpack.c.l.b16 %v243
      %v299 = vunpack.c.l.b16 %v244
      %v300 = vunpack.c.l.b16 %v245
      %v301 = vpack.c.b16 %v278, %v277
      %v302 = vpack.c.b16 %v280, %v279
      %v303 = vpack.c.b16 %v282, %v281
      %v304 = vpack.c.b16 %v284, %v283
      %v305 = vpack.c.b16 %v286, %v285
      %v306 = vpack.c.b16 %v288, %v287
      %v307 = vpack.c.b16 %v290, %v289
      %v308 = vpack.c.b16 %v292, %v291
      %v309 = vpack.c.b16 %v294, %v293
      %v310 = vpack.c.b16 %v296, %v295
      %v311 = vpack.c.b16 %v298, %v297
      %v312 = vpack.c.b16 %v300, %v299
      %vm325 = vcmask 523264
      %v327 = vsel %vm325, %v251, 0
      %329 = vmatpush.bf16.msra.mxu0 %v308
      %330 = vmatpush.bf16.msra.mxu0 %v307
      %331 = vmatpush.bf16.msra.mxu0 %v306
      %332 = vmatpush.bf16.msra.mxu0 %v305
      %333 = vmatpush.bf16.msra.mxu0 %v304
      %334 = vmatpush.bf16.msra.mxu0 %v303
      %335 = vmatpush.bf16.msra.mxu0 %v302
      %336 = vmatpush.bf16.msra.mxu0 %v301
      %337 = vmatmul.bf16.gmra.mxu0 %v250
      %v338 = vpop.f32.mrf.mxu0
      %v339 = vadd.f32 %v246, %v338
      %v340 = vpop.f32.mrf.mxu0
      %341 = vdwg.mxu0
      %342 = vmatpush.bf16.msra.mxu0 0
      %343 = vmatpush.bf16.msra.mxu0 0
      %344 = vmatpush.bf16.msra.mxu0 0
      %345 = vmatpush.bf16.msra.mxu0 0
      %346 = vmatpush.bf16.msra.mxu0 %v312
      %347 = vmatpush.bf16.msra.mxu0 %v311
      %348 = vmatpush.bf16.msra.mxu0 %v310
      %349 = vmatpush.bf16.msra.mxu0 %v309
      %350 = vmatmul.bf16.gmra.mxu0 %v327
      %v351 = vpop.f32.mrf.mxu0
      %v352 = vadd.f32 %v339, %v351
      %v353 = vpop.f32.mrf.mxu0
      %354 = vdwg.mxu0
      %vm355 = vcmask 258048
      %356 = vst.msk [vmem:[%s219] sm:$0x1f] %vm355, %v352
      %p357 = scmp.lt.s32.totalorder %s18, 1
      %s358 = scalar_select %p357, %s18, 1
      %p359 = scmp.lt.s32.totalorder %s19, 0
      %s360 = scalar_select %p359, %s19, 0
      %s361 = sadd.s32 %s360, %s358
      %s362 = smul.addr %s361, 8
      %s363 = scalar_lea.vmem %s3, %s362
      // Predicated region
      $region33: #{vit_input_layer.1} parent=31 // pred_check
        %p364 = pneg %p121
      $region34: #{vit_input_layer.1} parent=31 // pred_check_branch
        %366 = sbr.rel (%p364) target = $region36
      $region35: #{vit_input_layer.1} parent=31 // pred_region
        _
      $region36: #{vit_input_layer.1} parent=31 // pred_fallthru
        _
    $region32: #{vit_input_layer.1} parent=5 // pred_fallthru
      _
    %p367 = scmp.le.s32.totalorder 2, %s9
    // Predicated region
    $region37: #{vit_input_layer.1} parent=5 // pred_check
      %p368 = pneg %p367
    $region38: #{vit_input_layer.1} parent=5 // pred_check_branch
      %370 = sbr.rel (%p368) target = $region40
    $region39: #{vit_input_layer.1} parent=5 // pred_region
      %s371 = ssub.s32 %s9, 2
      // Predicated region
      $region41: #{vit_input_layer.1} parent=39 // pred_check
        %p372 = pneg %p127
      $region42: #{vit_input_layer.1} parent=39 // pred_check_branch
        %374 = sbr.rel (%p372) target = $region44
      $region43: #{vit_input_layer.1} parent=39 // pred_region
        %p375 = scmp.lt.s32.totalorder %s20, 1
        %s376 = scalar_select %p375, %s20, 1
        %p377 = scmp.lt.s32.totalorder %s21, 0
        %s378 = scalar_select %p377, %s21, 0
        %s379 = sadd.s32 %s378, %s376
        %s380 = smul.addr %s379, 8
        %s381 = scalar_lea.vmem %s3, %s380
      $region44: #{vit_input_layer.1} parent=39 // pred_fallthru
        _
    $region40: #{vit_input_layer.1} parent=5 // pred_fallthru
      _
  $region6: #{vit_input_layer.1} parent=0 // loop_footer
    %s13 = sadd.s32 1, %s9
  $region7: #{vit_input_layer.1} parent=0 // loop_footer_branch
    %8 = sbr.rel target = $region3
  $region8: #{vit_input_layer.1} parent=0 // loop_exit
    _

</llo_original>
